<compile_context>
chip_gen: v7x
topology: tpu7x:2x2x1
jax: 0.10.0
libtpu: 0.0.40
codegen_flags: <defaults>
</compile_context>

<pallas_src>
import functools

import jax
import jax.numpy as jnp
from jax.experimental import pallas as pl
from jax.experimental.pallas import tpu as pltpu

_SUBLANE = 8


def _round_up(x: int, m: int) -> int:
    return (x + m - 1) // m * m


def _mean_pool_kernel(x_ref, o_ref, acc_ref, *, inv_n):
    # x_ref: (TB, TN, D) tile; acc_ref: (TB, D) f32 accumulator.
    n = pl.program_id(1)

    @pl.when(n == 0)
    def _():
        acc_ref[...] = jnp.zeros_like(acc_ref)

    # Accumulate the chunk sum in f32 without materializing a full f32 tile.
    acc_ref[...] += jnp.sum(x_ref[...], axis=1, dtype=jnp.float32)

    @pl.when(n == pl.num_programs(1) - 1)
    def _():
        o_ref[...] = (acc_ref[...] * inv_n).astype(o_ref.dtype)


def _cls_copy_kernel(x_ref, o_ref):
    # x_ref / o_ref: (TB, D) — plain aligned copy of the already-sliced
    # first token; only one token per row ever leaves HBM.
    o_ref[...] = x_ref[...]


@functools.partial(jax.jit, static_argnames=("pool",))
def pooling(x: jax.Array, pool: str = "mean") -> jax.Array:
    """Pallas equivalent of Pooling(pool).forward(x) for x of shape (B, N, D)."""
    if pool not in ("mean", "cls"):
        raise ValueError("pool must be one of {mean, cls}")
    B, N, D = x.shape

    TB = _SUBLANE
    B_pad = _round_up(max(B, TB), TB)

    if pool == "cls":
        # Slice token 0 in the wrapper (N x less HBM traffic than loading the
        # whole sequence), then a cheap aligned Pallas copy.
        xc = x[:, 0, :]
        if B_pad != B:
            xc = jnp.pad(xc, ((0, B_pad - B), (0, 0)))
        out = pl.pallas_call(
            _cls_copy_kernel,
            out_shape=jax.ShapeDtypeStruct((B_pad, D), x.dtype),
            grid_spec=pltpu.PrefetchScalarGridSpec(
                num_scalar_prefetch=0,
                grid=(B_pad // TB,),
                in_specs=[pl.BlockSpec((TB, D), lambda b: (b, 0))],
                out_specs=pl.BlockSpec((TB, D), lambda b: (b, 0)),
            ),
            compiler_params=pltpu.CompilerParams(
                dimension_semantics=("parallel",)),
        )(xc)
        return out[:B]

    # ---- mean path: tiled N reduction with f32 scratch accumulator ----
    itemsize = jnp.dtype(x.dtype).itemsize
    # Target ~2 MiB per input tile (~4 MiB double-buffered) — well under the
    # scoped-VMEM default on every generation, including v7x's 64 MiB VMEM.
    target_bytes = 2 * 1024 * 1024
    tn = max(_SUBLANE, target_bytes // max(1, TB * D * itemsize))
    tn = (tn // _SUBLANE) * _SUBLANE
    tn = max(_SUBLANE, min(tn, _round_up(N, _SUBLANE)))
    N_pad = _round_up(N, tn)

    pad_b = B_pad - B
    pad_n = N_pad - N
    if pad_b or pad_n:
        # Zero padding is sum-safe; we divide by the true N below.
        x = jnp.pad(x, ((0, pad_b), (0, pad_n), (0, 0)))

    kernel = functools.partial(_mean_pool_kernel, inv_n=1.0 / N)
    out = pl.pallas_call(
        kernel,
        out_shape=jax.ShapeDtypeStruct((B_pad, D), x.dtype),
        grid_spec=pltpu.PrefetchScalarGridSpec(
            num_scalar_prefetch=0,
            grid=(B_pad // TB, N_pad // tn),      # reduction axis last
            in_specs=[pl.BlockSpec((TB, tn, D), lambda b, n: (b, n, 0))],
            out_specs=pl.BlockSpec((TB, D), lambda b, n: (b, 0)),
            scratch_shapes=[pltpu.VMEM((TB, D), jnp.float32)],
        ),
        compiler_params=pltpu.CompilerParams(
            dimension_semantics=("parallel", "arbitrary")),
    )(x)
    return out[:B]


if __name__ == "__main__":
    key = jax.random.PRNGKey(0)
    B, N, D = 2, 8, 32  # batch, seq, hidden
    x = jax.random.normal(key, (B, N, D), dtype=jnp.float32)

    out_mean = jax.block_until_ready(pooling(x, pool="mean"))
    out_cls = jax.block_until_ready(pooling(x, pool="cls"))

    # Reference checks (plain JAX)
    ref_mean = jnp.mean(x, axis=1)
    ref_cls = x[:, 0]
    assert out_mean.shape == (B, D) and out_cls.shape == (B, D)
    assert jnp.allclose(out_mean, ref_mean, atol=1e-5, rtol=1e-5)
    assert jnp.allclose(out_cls, ref_cls, atol=0.0, rtol=0.0)

    print("KERNEL_OK")
</pallas_src>

<mosaic_0001>
module attributes {stable_mosaic.version = 11 : i64} {
  func.func @_mean_pool_kernel(%arg0: i32, %arg1: i32, %arg2: memref<8x8x32xf32, #tpu.memory_space<vmem>>, %arg3: memref<8x32xf32, #tpu.memory_space<vmem>>, %arg4: memref<8x32xf32, #tpu.memory_space<vmem>>) attributes {dimension_semantics = [#tpu.dimension_semantics<parallel>, #tpu.dimension_semantics<arbitrary>], iteration_bounds = array<i64: 1, 1>, scalar_prefetch = 0 : i64, scratch_operands = 1 : i64, tpu.core_type = #tpu.core_type<tc>, window_params = [{transform_indices = @transform_0, window_bounds = array<i64: 8, 8, 32>}, {transform_indices = @transform_1, window_bounds = array<i64: 8, 32>}]} {
    %c0_i32 = arith.constant 0 : i32
    %0 = arith.cmpi eq, %arg1, %c0_i32 : i32
    %1 = arith.extui %0 : i1 to i32
    %c0_i32_0 = arith.constant 0 : i32
    %2 = arith.cmpi ne, %1, %c0_i32_0 : i32
    scf.if %2 {
      %cst_9 = arith.constant 0.000000e+00 : f32
      %11 = vector.broadcast %cst_9 : f32 to vector<8x32xf32>
      %c0_10 = arith.constant 0 : index
      %c0_11 = arith.constant 0 : index
      %12 = vector.load %arg4[%c0_10, %c0_11] : memref<8x32xf32, #tpu.memory_space<vmem>>, vector<8x32xf32>
      tpu.vector_store %arg4[%c0_10, %c0_11], %11 {strides = array<i32>} : memref<8x32xf32, #tpu.memory_space<vmem>>, vector<8x32xf32>,
    } else {
    }
    %c0 = arith.constant 0 : index
    %c0_1 = arith.constant 0 : index
    %3 = vector.load %arg4[%c0, %c0_1] : memref<8x32xf32, #tpu.memory_space<vmem>>, vector<8x32xf32>
    %c0_2 = arith.constant 0 : index
    %c0_3 = arith.constant 0 : index
    %c0_4 = arith.constant 0 : index
    %4 = vector.load %arg2[%c0_2, %c0_3, %c0_4] : memref<8x8x32xf32, #tpu.memory_space<vmem>>, vector<8x8x32xf32>
    %cst = arith.constant dense<0.000000e+00> : vector<8x32xf32>
    %5 = vector.multi_reduction <add>, %4, %cst [1] : vector<8x8x32xf32> to vector<8x32xf32>
    %6 = arith.addf %3, %5 : vector<8x32xf32>
    %c0_5 = arith.constant 0 : index
    %c0_6 = arith.constant 0 : index
    %7 = vector.load %arg4[%c0_5, %c0_6] : memref<8x32xf32, #tpu.memory_space<vmem>>, vector<8x32xf32>
    tpu.vector_store %arg4[%c0_5, %c0_6], %6 {strides = array<i32>} : memref<8x32xf32, #tpu.memory_space<vmem>>, vector<8x32xf32>,
    %c0_i32_7 = arith.constant 0 : i32
    %8 = arith.cmpi eq, %arg1, %c0_i32_7 : i32
    %9 = arith.extui %8 : i1 to i32
    %c0_i32_8 = arith.constant 0 : i32
    %10 = arith.cmpi ne, %9, %c0_i32_8 : i32
    scf.if %10 {
      %c0_9 = arith.constant 0 : index
      %c0_10 = arith.constant 0 : index
      %11 = vector.load %arg4[%c0_9, %c0_10] : memref<8x32xf32, #tpu.memory_space<vmem>>, vector<8x32xf32>
      %cst_11 = arith.constant 1.250000e-01 : f32
      %12 = vector.broadcast %cst_11 : f32 to vector<8x32xf32>
      %13 = arith.mulf %11, %12 : vector<8x32xf32>
      %c0_12 = arith.constant 0 : index
      %c0_13 = arith.constant 0 : index
      %14 = vector.load %arg3[%c0_12, %c0_13] : memref<8x32xf32, #tpu.memory_space<vmem>>, vector<8x32xf32>
      tpu.vector_store %arg3[%c0_12, %c0_13], %13 {strides = array<i32>} : memref<8x32xf32, #tpu.memory_space<vmem>>, vector<8x32xf32>,
    } else {
    }
    return
  }
  func.func @transform_0(%arg0: i32, %arg1: i32) -> (i32, i32, i32) {
    %c0_i32 = arith.constant 0 : i32
    %c0_i32_0 = arith.constant 0 : i32
    return %arg0, %arg1, %c0_i32 : i32, i32, i32
  }
  func.func @transform_1(%arg0: i32, %arg1: i32) -> (i32, i32) {
    %c0_i32 = arith.constant 0 : i32
    %c0_i32_0 = arith.constant 0 : i32
    return %arg0, %c0_i32 : i32, i32
  }
}

</mosaic_0001>

<llo_original>
// kernel: pooling.1
$region0: #{pooling.1}
  #allocation0 [shape = 'u32[]', space=smem, size = 0x4, offset = 0x4, fixed_abs, tag = 'smem constant byte address 0x4 - core index']
  #allocation1 [shape = 'u32[144,128]{1,0:T(1,128)}', space=vmem, size = 0x12000, scoped, tag = 'internal scratch']
  #allocation2 [shape = 'f32[8,32]{1,0:T(8,128)}', space=vmem, size = 0x1000, scoped, tag = 'scratch operand']
  %s0 = inlined_call_operand.vmem [shape: f32[8,8,32], index: 0, kind: input, shape index: {}]
  %s1 = inlined_call_operand.vmem [shape: f32[8,32], index: 1, kind: output, shape index: {}]
  %s2 = sld [smem:[#allocation0]]
  $region22: #{pooling.1} parent=0
    _
  %s4 = ssub.s32 1, %s2
  %s5 = scalar_select 0, %s4, %s2
  // Predicated region
  $region2: #{pooling.1} parent=0 // pred_check
    _
  $region3: #{pooling.1} parent=0 // pred_check_branch
    %7 = sbr.rel (0) target = $region5
  $region4: #{pooling.1} parent=0 // pred_region
    _
  $region5: #{pooling.1} parent=0 // pred_fallthru
    _
  %p8 = scmp.eq.s32.totalorder 0, 0
  // Predicated region
  $region6: #{pooling.1} parent=0 // pred_check
    %p9 = pneg %p8
  $region7: #{pooling.1} parent=0 // pred_check_branch
    %11 = sbr.rel (%p9) target = $region9
  $region8: #{pooling.1} parent=0 // pred_region
    %vm12 = vcmask 261120
    %13 = vst.msk [vmem:[#allocation2] sm:$0xff] %vm12, 0.0
  $region9: #{pooling.1} parent=0 // pred_fallthru
    _
  %v14 = vld [vmem:[#allocation2] sm:$0xff]
  %v15 = vld [vmem:[%s0] sm:$0xff]
  %v16 = vld [vmem:[%s0 + $0x8] sm:$0xff]
  %v17 = vld [vmem:[%s0 + $0x10] sm:$0xff]
  %v18 = vld [vmem:[%s0 + $0x18] sm:$0xff]
  %v19 = vld [vmem:[%s0 + $0x20] sm:$0xff]
  %v20 = vld [vmem:[%s0 + $0x28] sm:$0xff]
  %v21 = vld [vmem:[%s0 + $0x30] sm:$0xff]
  %v22 = vld [vmem:[%s0 + $0x38] sm:$0xff]
  %vm23 = vcmask 261120
  %v24 = vsel %vm23, %v15, 0.0
  %v25 = vrot.slane %v24, 4
  %v26 = vadd.f32 %v24, %v25
  %v27 = vrot.slane %v26, 2
  %v28 = vadd.f32 %v26, %v27
  %v29 = vrot.slane %v28, 1
  %v30 = vadd.f32 %v28, %v29
  %v31 = vsel %vm23, %v16, 0.0
  %v32 = vrot.slane %v31, 4
  %v33 = vadd.f32 %v31, %v32
  %v34 = vrot.slane %v33, 2
  %v35 = vadd.f32 %v33, %v34
  %v36 = vrot.slane %v35, 1
  %v37 = vadd.f32 %v35, %v36
  %v38 = vsel %vm23, %v17, 0.0
  %v39 = vrot.slane %v38, 4
  %v40 = vadd.f32 %v38, %v39
  %v41 = vrot.slane %v40, 2
  %v42 = vadd.f32 %v40, %v41
  %v43 = vrot.slane %v42, 1
  %v44 = vadd.f32 %v42, %v43
  %v45 = vsel %vm23, %v18, 0.0
  %v46 = vrot.slane %v45, 4
  %v47 = vadd.f32 %v45, %v46
  %v48 = vrot.slane %v47, 2
  %v49 = vadd.f32 %v47, %v48
  %v50 = vrot.slane %v49, 1
  %v51 = vadd.f32 %v49, %v50
  %v52 = vsel %vm23, %v19, 0.0
  %v53 = vrot.slane %v52, 4
  %v54 = vadd.f32 %v52, %v53
  %v55 = vrot.slane %v54, 2
  %v56 = vadd.f32 %v54, %v55
  %v57 = vrot.slane %v56, 1
  %v58 = vadd.f32 %v56, %v57
  %v59 = vsel %vm23, %v20, 0.0
  %v60 = vrot.slane %v59, 4
  %v61 = vadd.f32 %v59, %v60
  %v62 = vrot.slane %v61, 2
  %v63 = vadd.f32 %v61, %v62
  %v64 = vrot.slane %v63, 1
  %v65 = vadd.f32 %v63, %v64
  %v66 = vsel %vm23, %v21, 0.0
  %v67 = vrot.slane %v66, 4
  %v68 = vadd.f32 %v66, %v67
  %v69 = vrot.slane %v68, 2
  %v70 = vadd.f32 %v68, %v69
  %v71 = vrot.slane %v70, 1
  %v72 = vadd.f32 %v70, %v71
  %v73 = vsel %vm23, %v22, 0.0
  %v74 = vrot.slane %v73, 4
  %v75 = vadd.f32 %v73, %v74
  %v76 = vrot.slane %v75, 2
  %v77 = vadd.f32 %v75, %v76
  %v78 = vrot.slane %v77, 1
  %v79 = vadd.f32 %v77, %v78
  %vm88 = vcmask 1041409
  %v89 = vsel %vm88, %v37, %v30
  %vm90 = vcmask 1042434
  %v91 = vsel %vm90, %v44, %v89
  %vm92 = vcmask 1043459
  %v93 = vsel %vm92, %v51, %v91
  %vm94 = vcmask 1044484
  %v95 = vsel %vm94, %v58, %v93
  %vm96 = vcmask 1045509
  %v97 = vsel %vm96, %v65, %v95
  %vm98 = vcmask 1046534
  %v99 = vsel %vm98, %v72, %v97
  %vm100 = vcmask 1047559
  %v101 = vsel %vm100, %v79, %v99
  %v103 = vadd.f32 %v14, %v101
  %104 = vst.msk [vmem:[#allocation2] sm:$0xff] %vm23, %v103
  // Predicated region
  $region10: #{pooling.1} parent=0 // pred_check
    %p105 = pneg %p8
  $region11: #{pooling.1} parent=0 // pred_check_branch
    %107 = sbr.rel (%p105) target = $region13
  $region12: #{pooling.1} parent=0 // pred_region
    %v108 = vld [vmem:[#allocation2] sm:$0xff]
    %v109 = vmul.f32 %v108, 0.125
    %110 = vst.msk [vmem:[%s1] sm:$0xff] %vm23, %v109
  $region13: #{pooling.1} parent=0 // pred_fallthru
    _
  // Predicated region
  $region14: #{pooling.1} parent=0 // pred_check
    _
  $region15: #{pooling.1} parent=0 // pred_check_branch
    %112 = sbr.rel (0) target = $region17
  $region16: #{pooling.1} parent=0 // pred_region
    _
  $region17: #{pooling.1} parent=0 // pred_fallthru
    _
  // Predicated region
  $region18: #{pooling.1} parent=0 // pred_check
    _
  $region19: #{pooling.1} parent=0 // pred_check_branch
    %114 = sbr.rel (0) target = $region21
  $region20: #{pooling.1} parent=0 // pred_region
    _
  $region21: #{pooling.1} parent=0 // pred_fallthru
    _

</llo_original>
